<compile_context>
chip_gen: v6e
topology: v6e:2x2x1
jax: 0.10.0
libtpu: 0.0.40
codegen_flags: <defaults>
</compile_context>

<pallas_src>
import jax
import jax.numpy as jnp
from jax import lax
from jax.experimental import pallas as pl
from jax.experimental.pallas import tpu as pltpu

# Static shapes implied by the module.
_CI, _D, _H, _W = 3, 4, 4, 4
_F_IN = _CI * _D * _H * _W          # 192 input features per sample
_C1 = 4                             # conv1 out channels
_C2 = 5                             # conv2 out channels
_CONV_DN = ("NCDHW", "OIDHW", "NCDHW")


def gemm_bias_kernel(x_ref, w_ref, b_ref, o_ref):
    """Single fused GEMM + bias:  o = x @ W_eff + b_eff.

    x_ref : (N, 192)  flattened input samples
    w_ref : (192, 5)  composed conv1∘conv2 weights
    b_ref : (1, 5)    composed bias
    o_ref : (N, 5)
    """
    o_ref[...] = (
        jnp.dot(x_ref[...], w_ref[...], preferred_element_type=jnp.float32)
        + b_ref[...]
    )


def compose_weights(w1, b1, w2):
    """Fold conv1(+bias) and conv2 into a single affine map (W_eff, b_eff).

    Runs once at init (weight preprocessing, not part of the forward).
    """
    w1 = w1.astype(jnp.float32)
    b1 = b1.astype(jnp.float32)
    w2 = w2.astype(jnp.float32)

    # Linear part: push the 192-element identity basis through both convs.
    basis = jnp.eye(_F_IN, dtype=jnp.float32).reshape(_F_IN, _CI, _D, _H, _W)
    y1 = lax.conv_general_dilated(
        basis, w1, (1, 1, 1), "VALID", dimension_numbers=_CONV_DN)
    y2 = lax.conv_general_dilated(
        y1, w2, (1, 1, 1), "VALID", dimension_numbers=_CONV_DN)
    w_eff = y2.reshape(_F_IN, _C2)                                  # (192, 5)

    # Bias part: conv2 applied to the broadcast conv1 bias image.
    b_img = jnp.broadcast_to(b1.reshape(1, _C1, 1, 1, 1), (1, _C1, 3, 3, 3))
    b_eff = lax.conv_general_dilated(
        b_img, w2, (1, 1, 1), "VALID",
        dimension_numbers=_CONV_DN).reshape(1, _C2)                 # (1, 5)

    return w_eff, b_eff


@jax.jit
def fused_forward(x, w_eff, b_eff):
    """x: (N, 3, 4, 4, 4) NCDHW.  Returns (N, 5, 1, 1, 1)."""
    N = x.shape[0]
    assert x.shape[1:] == (_CI, _D, _H, _W), x.shape

    x_flat = x.astype(jnp.float32).reshape(N, _F_IN)                # (N, 192)

    out = pl.pallas_call(
        gemm_bias_kernel,
        out_shape=jax.ShapeDtypeStruct((N, _C2), jnp.float32),
        in_specs=[pl.BlockSpec(memory_space=pltpu.MemorySpace.VMEM)] * 3,
        out_specs=pl.BlockSpec(memory_space=pltpu.MemorySpace.VMEM),
        cost_estimate=pl.CostEstimate(
            flops=2 * N * _F_IN * _C2,
            transcendentals=0,
            bytes_accessed=4 * (N * _F_IN + _F_IN * _C2 + _C2 + N * _C2),
        ),
    )(x_flat, w_eff, b_eff)

    return out.reshape(N, _C2, 1, 1, 1)


class Model:
    """JAX/Pallas port of the reference module (deterministic init)."""

    def __init__(self, key):
        k1, k2, k3 = jax.random.split(key, 3)
        # Conv3d(3, 4, kernel_size=2, bias=True)
        self.w1 = jax.random.normal(k1, (_C1, _CI, 2, 2, 2), jnp.float32) * 0.1
        self.b1 = jax.random.normal(k2, (_C1,), jnp.float32) * 0.1
        # Conv3d(*, 5, kernel_size=3, bias=False) — in_channels fixed to 4.
        self.w2 = jax.random.normal(k3, (_C2, _C1, 3, 3, 3), jnp.float32) * 0.1
        # One-time composition of both linear layers into a single GEMM.
        self.w_eff, self.b_eff = compose_weights(self.w1, self.b1, self.w2)

    def __call__(self, x):
        return fused_forward(x, self.w_eff, self.b_eff)


def _reference(x, w1, b1, w2):
    y1 = lax.conv_general_dilated(
        x, w1, (1, 1, 1), "VALID", dimension_numbers=_CONV_DN
    ) + b1.reshape(1, -1, 1, 1, 1)
    y2 = lax.conv_general_dilated(
        y1, w2, (1, 1, 1), "VALID", dimension_numbers=_CONV_DN)
    return y2


if __name__ == "__main__":
    key = jax.random.PRNGKey(0)
    kx, kx2, kp = jax.random.split(key, 3)
    model = Model(kp)

    # Spec input: batch 1, matching the PyTorch module.
    x1 = jax.random.normal(kx, (1, 3, 4, 4, 4), jnp.float32)
    out1 = model(x1)
    jax.block_until_ready(out1)
    assert out1.shape == (1, 5, 1, 1, 1), out1.shape
    ref1 = _reference(x1, model.w1, model.b1, model.w2)
    assert jnp.allclose(out1, ref1, atol=1e-4, rtol=1e-4), (
        "batch-1 mismatch vs XLA conv reference")

    # Batched input exercises the (N, 192) GEMM row dimension.
    xb = jax.random.normal(kx2, (2, 3, 4, 4, 4), jnp.float32)
    outb = model(xb)
    jax.block_until_ready(outb)
    assert outb.shape == (2, 5, 1, 1, 1), outb.shape
    refb = _reference(xb, model.w1, model.b1, model.w2)
    assert jnp.allclose(outb, refb, atol=1e-4, rtol=1e-4), (
        "batch-2 mismatch vs XLA conv reference")

    print("KERNEL_OK")
</pallas_src>

<mosaic_0001>
module attributes {stable_mosaic.version = 11 : i64} {
  func.func @gemm_bias_kernel(%arg0: memref<1x192xf32, #tpu.memory_space<vmem>>, %arg1: memref<192x5xf32, #tpu.memory_space<vmem>>, %arg2: memref<1x5xf32, #tpu.memory_space<vmem>>, %arg3: memref<1x5xf32, #tpu.memory_space<vmem>>) attributes {dimension_semantics = [], scalar_prefetch = 0 : i64, scratch_operands = 0 : i64, tpu.core_type = #tpu.core_type<tc>} {
    %c0 = arith.constant 0 : index
    %c0_0 = arith.constant 0 : index
    %0 = vector.load %arg0[%c0, %c0_0] : memref<1x192xf32, #tpu.memory_space<vmem>>, vector<1x192xf32>
    %c0_1 = arith.constant 0 : index
    %c0_2 = arith.constant 0 : index
    %1 = vector.load %arg1[%c0_1, %c0_2] : memref<192x5xf32, #tpu.memory_space<vmem>>, vector<192x5xf32>
    %cst = arith.constant dense<0.000000e+00> : vector<1x5xf32>
    %2 = tpu.matmul %0, %1, %cst {dimension_numbers = #tpu.dot_dimension_numbers<[1], [0], [0], [1], [0, 0, 1, 1], [], []>} : vector<1x192xf32>, vector<192x5xf32>, vector<1x5xf32> -> vector<1x5xf32>
    %c0_3 = arith.constant 0 : index
    %c0_4 = arith.constant 0 : index
    %3 = vector.load %arg2[%c0_3, %c0_4] : memref<1x5xf32, #tpu.memory_space<vmem>>, vector<1x5xf32>
    %4 = arith.addf %2, %3 : vector<1x5xf32>
    %c0_5 = arith.constant 0 : index
    %c0_6 = arith.constant 0 : index
    %5 = vector.load %arg3[%c0_5, %c0_6] : memref<1x5xf32, #tpu.memory_space<vmem>>, vector<1x5xf32>
    tpu.vector_store %arg3[%c0_5, %c0_6], %4 {strides = array<i32>} : memref<1x5xf32, #tpu.memory_space<vmem>>, vector<1x5xf32>,
    return
  }
}

</mosaic_0001>

<llo_original>
// kernel: fused_forward.1
$region0: #{fused_forward.1}
  #allocation0 [shape = 'u32[]', space=smem, size = 0x4, offset = 0x4, fixed_abs, tag = 'smem constant byte address 0x4 - core index']
  #allocation1 [shape = 'u32[144,128]{1,0:T(1,128)}', space=vmem, size = 0x12000, scoped, tag = 'internal scratch']
  %s0 = inlined_call_operand.vmem [shape: f32[1,192], index: 0, kind: input, shape index: {}]
  %s1 = inlined_call_operand.vmem [shape: f32[192,5], index: 1, kind: input, shape index: {}]
  %s2 = inlined_call_operand.vmem [shape: f32[1,5], index: 2, kind: input, shape index: {}]
  %s3 = inlined_call_operand.hbm [shape: f32[1,5], index: 3, kind: output, shape index: {}]
  %s4 = sld [smem:[#allocation0]]
  $region22: #{fused_forward.1} parent=0
    _
  %s6 = ssub.s32 1, %s4
  %s7 = scalar_select 0, %s6, %s4
  $region1: #{fused_forward.1} parent=0
    #allocation2 [shape = 'u8[512]{0}', space=vmem, size = 0x400, scoped, tag = 'output window, operand 0, single buffered']
    #allocation3 [shape = 's32[1]{0}', space=sflag, size = 0x4, scoped, tag = 'scoped memory for fused_forward.1']
    %8 = vsyncpa [#allocation3], 0
    // Predicated region
    $region2: #{fused_forward.1} parent=1 // pred_check
      _
    $region3: #{fused_forward.1} parent=1 // pred_check_branch
      %10 = sbr.rel (0) target = $region5
    $region4: #{fused_forward.1} parent=1 // pred_region
      _
    $region5: #{fused_forward.1} parent=1 // pred_fallthru
      _
    // Predicated region
    $region6: #{fused_forward.1} parent=1 // pred_check
      _
    $region7: #{fused_forward.1} parent=1 // pred_check_branch
      %12 = sbr.rel (0) target = $region9
    $region8: #{fused_forward.1} parent=1 // pred_region
      _
    $region9: #{fused_forward.1} parent=1 // pred_fallthru
      _
    // Predicated region
    $region10: #{fused_forward.1} parent=1 // pred_check
      _
    $region11: #{fused_forward.1} parent=1 // pred_check_branch
      %14 = sbr.rel (0) target = $region13
    $region12: #{fused_forward.1} parent=1 // pred_region
      _
    $region13: #{fused_forward.1} parent=1 // pred_fallthru
      _
    %v15 = vld [vmem:[%s0] sm:$0x3]
    %v16 = vld [vmem:[%s1] sm:$0xff]
    %v17 = vld [vmem:[%s1 + $0x8] sm:$0xff]
    %v18 = vld [vmem:[%s1 + $0x10] sm:$0xff]
    %v19 = vld [vmem:[%s1 + $0x18] sm:$0xff]
    %v20 = vld [vmem:[%s1 + $0x20] sm:$0xff]
    %v21 = vld [vmem:[%s1 + $0x28] sm:$0xff]
    %v22 = vld [vmem:[%s1 + $0x30] sm:$0xff]
    %v23 = vld [vmem:[%s1 + $0x38] sm:$0xff]
    %v24 = vld [vmem:[%s1 + $0x40] sm:$0xff]
    %v25 = vld [vmem:[%s1 + $0x48] sm:$0xff]
    %v26 = vld [vmem:[%s1 + $0x50] sm:$0xff]
    %v27 = vld [vmem:[%s1 + $0x58] sm:$0xff]
    %v28 = vld [vmem:[%s1 + $0x60] sm:$0xff]
    %v29 = vld [vmem:[%s1 + $0x68] sm:$0xff]
    %v30 = vld [vmem:[%s1 + $0x70] sm:$0xff]
    %v31 = vld [vmem:[%s1 + $0x78] sm:$0xff]
    %v32 = vld [vmem:[%s1 + $0x80] sm:$0xff]
    %v33 = vld [vmem:[%s1 + $0x88] sm:$0xff]
    %v34 = vld [vmem:[%s1 + $0x90] sm:$0xff]
    %v35 = vld [vmem:[%s1 + $0x98] sm:$0xff]
    %v36 = vld [vmem:[%s1 + $0xa0] sm:$0xff]
    %v37 = vld [vmem:[%s1 + $0xa8] sm:$0xff]
    %v38 = vld [vmem:[%s1 + $0xb0] sm:$0xff]
    %v39 = vld [vmem:[%s1 + $0xb8] sm:$0xff]
    %v40 = vld [vmem:[%s2] sm:$0x1]
    %v42 = vlaneseq
    %v43 = vshrl.u32 %v42, 7
    %v44 = vsub.s32 0, %v43
    %v45 = vrot.slane %v15, %v44
    %v46 = vlaneseq
    %v47 = vshrl.u32 %v46, 7
    %v48 = vsub.s32 1, %v47
    %v49 = vrot.slane %v15, %v48
    %vm51 = vcmask 523264
    %v52 = vsel %vm51, %v49, 0
    %54 = vmatprep.subr.mxu0 0.0
    %55 = vmatpush1.msra.mxu0 %v31
    %56 = vmatprep.subr.mxu0 0.0
    %57 = vmatpush1.msra.mxu0 %v30
    %58 = vmatprep.subr.mxu0 0.0
    %59 = vmatpush1.msra.mxu0 %v29
    %60 = vmatprep.subr.mxu0 0.0
    %61 = vmatpush1.msra.mxu0 %v28
    %62 = vmatprep.subr.mxu0 0.0
    %63 = vmatpush1.msra.mxu0 %v27
    %64 = vmatprep.subr.mxu0 0.0
    %65 = vmatpush1.msra.mxu0 %v26
    %66 = vmatprep.subr.mxu0 0.0
    %67 = vmatpush1.msra.mxu0 %v25
    %68 = vmatprep.subr.mxu0 0.0
    %69 = vmatpush1.msra.mxu0 %v24
    %70 = vmatprep.subr.mxu0 0.0
    %71 = vmatpush1.msra.mxu0 %v23
    %72 = vmatprep.subr.mxu0 0.0
    %73 = vmatpush1.msra.mxu0 %v22
    %74 = vmatprep.subr.mxu0 0.0
    %75 = vmatpush1.msra.mxu0 %v21
    %76 = vmatprep.subr.mxu0 0.0
    %77 = vmatpush1.msra.mxu0 %v20
    %78 = vmatprep.subr.mxu0 0.0
    %79 = vmatpush1.msra.mxu0 %v19
    %80 = vmatprep.subr.mxu0 0.0
    %81 = vmatpush1.msra.mxu0 %v18
    %82 = vmatprep.subr.mxu0 0.0
    %83 = vmatpush1.msra.mxu0 %v17
    %84 = vmatprep.subr.mxu0 0.0
    %85 = vmatpush1.msra.mxu0 %v16
    %86 = vmatprep.subr.mxu0 0.0
    %87 = vmatpush2.msra.mxu0 0.0
    %88 = vmatprep.subr.mxu0 0.0
    %89 = vmatpush2.msra.mxu0 0.0
    %90 = vmatprep.subr.mxu0 0.0
    %91 = vmatpush2.msra.mxu0 0.0
    %92 = vmatprep.subr.mxu0 0.0
    %93 = vmatpush2.msra.mxu0 0.0
    %94 = vmatprep.subr.mxu0 0.0
    %95 = vmatpush2.msra.mxu0 0.0
    %96 = vmatprep.subr.mxu0 0.0
    %97 = vmatpush2.msra.mxu0 0.0
    %98 = vmatprep.subr.mxu0 0.0
    %99 = vmatpush2.msra.mxu0 0.0
    %100 = vmatprep.subr.mxu0 0.0
    %101 = vmatpush2.msra.mxu0 0.0
    %102 = vmatprep.subr.mxu0 0.0
    %103 = vmatpush2.msra.mxu0 %v39
    %104 = vmatprep.subr.mxu0 0.0
    %105 = vmatpush2.msra.mxu0 %v38
    %106 = vmatprep.subr.mxu0 0.0
    %107 = vmatpush2.msra.mxu0 %v37
    %108 = vmatprep.subr.mxu0 0.0
    %109 = vmatpush2.msra.mxu0 %v36
    %110 = vmatprep.subr.mxu0 0.0
    %111 = vmatpush2.msra.mxu0 %v35
    %112 = vmatprep.subr.mxu0 0.0
    %113 = vmatpush2.msra.mxu0 %v34
    %114 = vmatprep.subr.mxu0 0.0
    %115 = vmatpush2.msra.mxu0 %v33
    %116 = vmatprep.subr.mxu0 0.0
    %117 = vmatpush2.msra.mxu0 %v32
    %118 = vmatprep.mubr.f32.mxu0 %v52
    %119 = vmatmul.mubr.f32.gmra.mxu0 %v45
    %v120 = vpop.f32.mrf.mxu0
    %v121 = vadd.f32 %v40, %v120
    %v122 = vpop.f32.mrf.mxu0
    %123 = vdwg.mxu0
    %vm124 = vcmask 32768
    %125 = vst.msk [vmem:[#allocation2] sm:$0x1] %vm124, %v121
    // Predicated region
    $region14: #{fused_forward.1} parent=1 // pred_check
      _
    $region15: #{fused_forward.1} parent=1 // pred_check_branch
      %127 = sbr.rel (0) target = $region17
    $region16: #{fused_forward.1} parent=1 // pred_region
      %s129 = ssub.s32 16, 16
      %130 = vsyncadd [#allocation3], %s129
      %s132 = sshll.u32 [#allocation2], 4
      %s133 = int_to_ptr.vmem [resolvable:$true] %s132
      %135 = dma.vmem_to_hbm [thread:$0]  %s133, 16, %s3, [#allocation3]
    $region17: #{fused_forward.1} parent=1 // pred_fallthru
      _
    // Predicated region
    $region18: #{fused_forward.1} parent=1 // pred_check
      _
    $region19: #{fused_forward.1} parent=1 // pred_check_branch
      %137 = sbr.rel (0) target = $region21
    $region20: #{fused_forward.1} parent=1 // pred_region
      %138 = dma.done [#allocation3], 16
    $region21: #{fused_forward.1} parent=1 // pred_fallthru
      _
    %139 = vsyncpa [#allocation3], 1

</llo_original>
